<compile_context>
chip_gen: v7x
topology: tpu7x:2x2x1
jax: 0.10.0
libtpu: 0.0.40
codegen_flags: <defaults>
</compile_context>

<pallas_src>
import functools

import numpy as np
import jax
import jax.numpy as jnp
from jax import lax
from jax.experimental import pallas as pl
from jax.experimental.pallas import tpu as pltpu


def digits_convnet_kernel(x_ref, w1_ref, b1_ref, w2_ref, b2_ref, w3_ref, b3_ref, o_ref):
    """One batch tile; compute is feature-major (batch on the 128-wide lane axis).

    x_ref  : (Nb, 64)    bf16  flattened 8x8 inputs, batch-major (HBM layout, no transpose)
    w1_ref : (4, 72, 64) bf16  conv1-as-matmul, one 72-row slab per 2x2 pool offset
                               (slab s = 2*di+dj, row = c*9+pi*3+pj, col = ii*8+jj)
    b1_ref : (72, 1)     f32   conv1 bias per pooled row (c*9+pi*3+pj)
    w2_ref : (4, 72)     f32   conv2 (1x1 output map) as a dense matmul
    b2_ref : (4, 1)      f32
    w3_ref : (16, 4)     f32   linear weight, zero-padded from 10 to 16 rows
    b3_ref : (16, 1)     f32
    o_ref  : (16, Nb)    f32   logits (rows 10..15 junk), batch on lanes
    """
    x = x_ref[...]                                    # (Nb, 64) bf16
    nt = (((1,), (1,)), ((), ()))                     # contract last dims: w_s @ x^T, on-chip

    # conv1 + 2x2 maxpool: four slab matmuls max-accumulated into one (72, Nb)
    # buffer (same FLOPs as one (288,64) matmul, 4x smaller live intermediate).
    pooled = lax.dot_general(w1_ref[0], x, nt, preferred_element_type=jnp.float32)
    for s in range(1, 4):
        ys = lax.dot_general(w1_ref[s], x, nt, preferred_element_type=jnp.float32)
        pooled = jnp.maximum(pooled, ys)

    # relu(conv1 + b1) -> maxpool -> relu  ==  relu(maxpool(conv1) + b1)
    # (bias constant within each 2x2 window, relu monotone; post-pool relu is a no-op).
    pooled = jnp.maximum(pooled + b1_ref[...], 0.0)   # (72, Nb) f32

    # conv2 over the 3x3 map == dense matmul; lane-dense (4, Nb) output.
    h = jnp.dot(w2_ref[...], pooled, preferred_element_type=jnp.float32) + b2_ref[...]
    h = jnp.maximum(h, 0.0)

    # linear 4 -> 10 (padded to 16 rows for a full-sublane store), lane-dense.
    o_ref[...] = jnp.dot(w3_ref[...], h, preferred_element_type=jnp.float32) + b3_ref[...]


def _round_up(v, m):
    return -(-v // m) * m


def _pick_batch_tile(n, block_n):
    """Lane-align to 128, cap at block_n, and prefer >= 2 grid blocks when the
    batch allows so v7x's two TensorCores both get work (v5e/v6e: 1 TC, no-op)."""
    n128 = _round_up(max(n, 1), 128)
    bn = min(_round_up(block_n, 128), n128)
    if n128 // bn < 2 and bn > 128:
        bn = max(128, _round_up(n128 // 2, 128))
    return bn, _round_up(n128, bn)


def _conv1_pool_slabs(w1):
    """Fold conv1's im2col into four (72, 64) bf16 slabs, one per 2x2 pool offset.

    Slab s = 2*di + dj; row = c*9 + pi*3 + pj over (channel, pooled output pos);
    col = ii*8 + jj over the flattened 8x8 input.  With this ordering the 2x2
    maxpool becomes a max-accumulate over the four slab matmul results.
    """
    # sel[p, d, k, i] = 1  iff  i == 2*p + d + k   (static, built host-side).
    sel = np.zeros((3, 2, 3, 8), np.float32)
    for p in range(3):
        for d in range(2):
            for k in range(3):
                sel[p, d, k, 2 * p + d + k] = 1.0
    sel = jnp.asarray(sel)
    w1c = w1[:, 0].astype(jnp.float32)                               # (8, 3, 3)
    w_eff = jnp.einsum('ckl,pdki,qelj->decpqij', w1c, sel, sel)      # (2,2,8,3,3,8,8)
    return w_eff.reshape(4, 72, 64).astype(jnp.bfloat16)


@functools.partial(jax.jit, static_argnames=("block_n",))
def digits_convnet_forward(x, params, *, block_n=2048):
    """x: (N, 8, 8) f32 -> (N, 10) f32 via a single batch-tiled pallas_call."""
    w1, b1, w2, b2, w3, b3 = params
    n = x.shape[0]
    bn, n_pad = _pick_batch_tile(n, block_n)

    # --- wrapper-side layout plumbing (fuses into a single XLA copy under jit) ---
    # Batch-major, bf16, NO transpose: the kernel reads exactly this layout.
    x2d = jnp.pad(x.reshape(n, 64).astype(jnp.bfloat16), ((0, n_pad - n), (0, 0)))

    w1m = _conv1_pool_slabs(w1)                                      # (4, 72, 64) bf16
    b1r = jnp.repeat(b1.astype(jnp.float32), 9).reshape(72, 1)       # row = c*9+pi*3+pj
    w2f = w2.astype(jnp.float32).reshape(4, 72)                      # col = c*9+ki*3+kj
    b2r = b2.astype(jnp.float32).reshape(4, 1)
    w3p = jnp.pad(w3.astype(jnp.float32), ((0, 6), (0, 0)))          # (16, 4), rows 10..15 zero
    b3p = jnp.pad(b3.astype(jnp.float32), (0, 6)).reshape(16, 1)

    grid = (n_pad // bn,)
    const2 = lambda i: (0, 0)       # resident weights: same block every grid step
    const3 = lambda i: (0, 0, 0)

    flops = 2 * n_pad * (288 * 64 + 4 * 72 + 16 * 4)
    bytes_accessed = (2 * 64 * n_pad + 4 * 16 * n_pad               # bf16 x in, f32 logits out
                      + 2 * 4 * 72 * 64 + 4 * (72 + 4 * 72 + 4 + 16 * 4 + 16))

    out = pl.pallas_call(
        digits_convnet_kernel,
        out_shape=jax.ShapeDtypeStruct((16, n_pad), jnp.float32),
        grid=grid,
        in_specs=[
            pl.BlockSpec((bn, 64), lambda i: (i, 0)),                # x: tiled over batch rows
            pl.BlockSpec((4, 72, 64), const3),
            pl.BlockSpec((72, 1), const2),
            pl.BlockSpec((4, 72), const2),
            pl.BlockSpec((4, 1), const2),
            pl.BlockSpec((16, 4), const2),
            pl.BlockSpec((16, 1), const2),
        ],
        out_specs=pl.BlockSpec((16, bn), lambda i: (0, i)),
        compiler_params=pltpu.CompilerParams(
            dimension_semantics=("parallel",)),                      # v7x: batch blocks over 2 TCs
        cost_estimate=pl.CostEstimate(
            flops=flops, transcendentals=0, bytes_accessed=bytes_accessed),
    )(x2d, w1m, b1r, w2f, b2r, w3p, b3p)

    return out[:10, :n].T                                            # (N, 10) f32


def init_params(key):
    """Deterministic init matching the PyTorch layer shapes (uniform +/- 1/sqrt(fan_in))."""
    ks = jax.random.split(key, 6)

    def u(k, shape, fan_in):
        bound = 1.0 / float(fan_in) ** 0.5
        return jax.random.uniform(k, shape, jnp.float32, -bound, bound)

    w1 = u(ks[0], (8, 1, 3, 3), 9)      # Conv2d(1, 8, 3)
    b1 = u(ks[1], (8,), 9)
    w2 = u(ks[2], (4, 8, 3, 3), 72)     # Conv2d(8, 4, 3)
    b2 = u(ks[3], (4,), 72)
    w3 = u(ks[4], (10, 4), 4)           # Linear(4, 10)
    b3 = u(ks[5], (10,), 4)
    return (w1, b1, w2, b2, w3, b3)


def reference_forward(x, params):
    """Pure-JAX (XLA) f32 reference in NCHW, mirroring the PyTorch module exactly."""
    w1, b1, w2, b2, w3, b3 = params
    dn = ("NCHW", "OIHW", "NCHW")
    xb = x[:, None, :, :]                                              # (N,1,8,8)
    y = lax.conv_general_dilated(xb, w1, (1, 1), "VALID", dimension_numbers=dn)
    y = jax.nn.relu(y + b1[None, :, None, None])                       # (N,8,6,6)
    y = lax.reduce_window(y, -jnp.inf, lax.max, (1, 1, 2, 2), (1, 1, 2, 2), "VALID")
    y = jax.nn.relu(y)                                                 # (N,8,3,3)
    y = lax.conv_general_dilated(y, w2, (1, 1), "VALID", dimension_numbers=dn)
    y = jax.nn.relu(y + b2[None, :, None, None])                       # (N,4,1,1)
    y = y.reshape(x.shape[0], 4)
    return y @ w3.T + b3                                               # (N,10)


if __name__ == "__main__":
    key = jax.random.PRNGKey(0)
    pkey, xkey = jax.random.split(key)
    params = init_params(pkey)

    N = 4
    x = jax.random.normal(xkey, (N, 8, 8), jnp.float32)

    out = digits_convnet_forward(x, params)
    out = jax.block_until_ready(out)

    ref = reference_forward(x, params)
    assert out.shape == (N, 10)
    # bf16 input / conv1-weight stream (f32 accumulation) -> relaxed tolerance vs f32 ref.
    assert jnp.allclose(out, ref, atol=2e-2, rtol=2e-2), "Pallas kernel mismatch vs JAX reference"

    print("KERNEL_OK")
</pallas_src>

<mosaic_0001>
module attributes {stable_mosaic.version = 11 : i64} {
  func.func @digits_convnet_kernel(%arg0: i32, %arg1: memref<128x64xbf16, #tpu.memory_space<vmem>>, %arg2: memref<4x72x64xbf16, #tpu.memory_space<vmem>>, %arg3: memref<72x1xf32, #tpu.memory_space<vmem>>, %arg4: memref<4x72xf32, #tpu.memory_space<vmem>>, %arg5: memref<4x1xf32, #tpu.memory_space<vmem>>, %arg6: memref<16x4xf32, #tpu.memory_space<vmem>>, %arg7: memref<16x1xf32, #tpu.memory_space<vmem>>, %arg8: memref<16x128xf32, #tpu.memory_space<vmem>>) attributes {dimension_semantics = [#tpu.dimension_semantics<parallel>], iteration_bounds = array<i64: 1>, scalar_prefetch = 0 : i64, scratch_operands = 0 : i64, tpu.core_type = #tpu.core_type<tc>, window_params = [{transform_indices = @transform_0, window_bounds = array<i64: 128, 64>}, {pipeline_mode = #tpu.pipeline_mode<synchronous>, transform_indices = @transform_1, window_bounds = array<i64: 4, 72, 64>}, {pipeline_mode = #tpu.pipeline_mode<synchronous>, transform_indices = @transform_2, window_bounds = array<i64: 72, 1>}, {pipeline_mode = #tpu.pipeline_mode<synchronous>, transform_indices = @transform_3, window_bounds = array<i64: 4, 72>}, {pipeline_mode = #tpu.pipeline_mode<synchronous>, transform_indices = @transform_4, window_bounds = array<i64: 4, 1>}, {pipeline_mode = #tpu.pipeline_mode<synchronous>, transform_indices = @transform_5, window_bounds = array<i64: 16, 4>}, {pipeline_mode = #tpu.pipeline_mode<synchronous>, transform_indices = @transform_6, window_bounds = array<i64: 16, 1>}, {transform_indices = @transform_7, window_bounds = array<i64: 16, 128>}]} {
    %c0 = arith.constant 0 : index
    %c0_0 = arith.constant 0 : index
    %0 = vector.load %arg1[%c0, %c0_0] : memref<128x64xbf16, #tpu.memory_space<vmem>>, vector<128x64xbf16>
    %c0_1 = arith.constant 0 : index
    %c0_2 = arith.constant 0 : index
    %c0_3 = arith.constant 0 : index
    %1 = vector.load %arg2[%c0_1, %c0_2, %c0_3] : memref<4x72x64xbf16, #tpu.memory_space<vmem>>, vector<1x72x64xbf16>
    %2 = vector.shape_cast %1 : vector<1x72x64xbf16> to vector<72x64xbf16>
    %cst = arith.constant dense<0.000000e+00> : vector<72x128xf32>
    %3 = tpu.matmul %2, %0, %cst {dimension_numbers = #tpu.dot_dimension_numbers<[1], [1], [0], [0], [0, 0, 1, 0], [], []>} : vector<72x64xbf16>, vector<128x64xbf16>, vector<72x128xf32> -> vector<72x128xf32>
    %c1 = arith.constant 1 : index
    %c0_4 = arith.constant 0 : index
    %c0_5 = arith.constant 0 : index
    %4 = vector.load %arg2[%c1, %c0_4, %c0_5] : memref<4x72x64xbf16, #tpu.memory_space<vmem>>, vector<1x72x64xbf16>
    %5 = vector.shape_cast %4 : vector<1x72x64xbf16> to vector<72x64xbf16>
    %cst_6 = arith.constant dense<0.000000e+00> : vector<72x128xf32>
    %6 = tpu.matmul %5, %0, %cst_6 {dimension_numbers = #tpu.dot_dimension_numbers<[1], [1], [0], [0], [0, 0, 1, 0], [], []>} : vector<72x64xbf16>, vector<128x64xbf16>, vector<72x128xf32> -> vector<72x128xf32>
    %7 = arith.maximumf %3, %6 : vector<72x128xf32>
    %c2 = arith.constant 2 : index
    %c0_7 = arith.constant 0 : index
    %c0_8 = arith.constant 0 : index
    %8 = vector.load %arg2[%c2, %c0_7, %c0_8] : memref<4x72x64xbf16, #tpu.memory_space<vmem>>, vector<1x72x64xbf16>
    %9 = vector.shape_cast %8 : vector<1x72x64xbf16> to vector<72x64xbf16>
    %cst_9 = arith.constant dense<0.000000e+00> : vector<72x128xf32>
    %10 = tpu.matmul %9, %0, %cst_9 {dimension_numbers = #tpu.dot_dimension_numbers<[1], [1], [0], [0], [0, 0, 1, 0], [], []>} : vector<72x64xbf16>, vector<128x64xbf16>, vector<72x128xf32> -> vector<72x128xf32>
    %11 = arith.maximumf %7, %10 : vector<72x128xf32>
    %c3 = arith.constant 3 : index
    %c0_10 = arith.constant 0 : index
    %c0_11 = arith.constant 0 : index
    %12 = vector.load %arg2[%c3, %c0_10, %c0_11] : memref<4x72x64xbf16, #tpu.memory_space<vmem>>, vector<1x72x64xbf16>
    %13 = vector.shape_cast %12 : vector<1x72x64xbf16> to vector<72x64xbf16>
    %cst_12 = arith.constant dense<0.000000e+00> : vector<72x128xf32>
    %14 = tpu.matmul %13, %0, %cst_12 {dimension_numbers = #tpu.dot_dimension_numbers<[1], [1], [0], [0], [0, 0, 1, 0], [], []>} : vector<72x64xbf16>, vector<128x64xbf16>, vector<72x128xf32> -> vector<72x128xf32>
    %15 = arith.maximumf %11, %14 : vector<72x128xf32>
    %c0_13 = arith.constant 0 : index
    %c0_14 = arith.constant 0 : index
    %16 = vector.load %arg3[%c0_13, %c0_14] : memref<72x1xf32, #tpu.memory_space<vmem>>, vector<72x1xf32>
    %17 = vector.broadcast %16 : vector<72x1xf32> to vector<72x128xf32>
    %18 = arith.addf %15, %17 : vector<72x128xf32>
    %cst_15 = arith.constant 0.000000e+00 : f32
    %19 = vector.broadcast %cst_15 : f32 to vector<72x128xf32>
    %20 = arith.maximumf %18, %19 : vector<72x128xf32>
    %c0_16 = arith.constant 0 : index
    %c0_17 = arith.constant 0 : index
    %21 = vector.load %arg4[%c0_16, %c0_17] : memref<4x72xf32, #tpu.memory_space<vmem>>, vector<4x72xf32>
    %cst_18 = arith.constant dense<0.000000e+00> : vector<4x128xf32>
    %22 = tpu.matmul %21, %20, %cst_18 {dimension_numbers = #tpu.dot_dimension_numbers<[1], [0], [0], [1], [0, 0, 1, 1], [], []>} : vector<4x72xf32>, vector<72x128xf32>, vector<4x128xf32> -> vector<4x128xf32>
    %c0_19 = arith.constant 0 : index
    %c0_20 = arith.constant 0 : index
    %23 = vector.load %arg5[%c0_19, %c0_20] : memref<4x1xf32, #tpu.memory_space<vmem>>, vector<4x1xf32>
    %24 = vector.broadcast %23 : vector<4x1xf32> to vector<4x128xf32>
    %25 = arith.addf %22, %24 : vector<4x128xf32>
    %cst_21 = arith.constant 0.000000e+00 : f32
    %26 = vector.broadcast %cst_21 : f32 to vector<4x128xf32>
    %27 = arith.maximumf %25, %26 : vector<4x128xf32>
    %c0_22 = arith.constant 0 : index
    %c0_23 = arith.constant 0 : index
    %28 = vector.load %arg6[%c0_22, %c0_23] : memref<16x4xf32, #tpu.memory_space<vmem>>, vector<16x4xf32>
    %cst_24 = arith.constant dense<0.000000e+00> : vector<16x128xf32>
    %29 = tpu.matmul %28, %27, %cst_24 {dimension_numbers = #tpu.dot_dimension_numbers<[1], [0], [0], [1], [0, 0, 1, 1], [], []>} : vector<16x4xf32>, vector<4x128xf32>, vector<16x128xf32> -> vector<16x128xf32>
    %c0_25 = arith.constant 0 : index
    %c0_26 = arith.constant 0 : index
    %30 = vector.load %arg7[%c0_25, %c0_26] : memref<16x1xf32, #tpu.memory_space<vmem>>, vector<16x1xf32>
    %31 = vector.broadcast %30 : vector<16x1xf32> to vector<16x128xf32>
    %32 = arith.addf %29, %31 : vector<16x128xf32>
    %c0_27 = arith.constant 0 : index
    %c0_28 = arith.constant 0 : index
    %33 = vector.load %arg8[%c0_27, %c0_28] : memref<16x128xf32, #tpu.memory_space<vmem>>, vector<16x128xf32>
    tpu.vector_store %arg8[%c0_27, %c0_28], %32 {strides = array<i32>} : memref<16x128xf32, #tpu.memory_space<vmem>>, vector<16x128xf32>,
    return
  }
  func.func @transform_0(%arg0: i32) -> (i32, i32) {
    %c0_i32 = arith.constant 0 : i32
    %c0_i32_0 = arith.constant 0 : i32
    return %arg0, %c0_i32 : i32, i32
  }
  func.func @transform_1(%arg0: i32) -> (i32, i32, i32) {
    %c0_i32 = arith.constant 0 : i32
    %c0_i32_0 = arith.constant 0 : i32
    %c0_i32_1 = arith.constant 0 : i32
    %c0_i32_2 = arith.constant 0 : i32
    return %c0_i32, %c0_i32_0, %c0_i32_1 : i32, i32, i32
  }
  func.func @transform_2(%arg0: i32) -> (i32, i32) {
    %c0_i32 = arith.constant 0 : i32
    %c0_i32_0 = arith.constant 0 : i32
    %c0_i32_1 = arith.constant 0 : i32
    return %c0_i32, %c0_i32_0 : i32, i32
  }
  func.func @transform_3(%arg0: i32) -> (i32, i32) {
    %c0_i32 = arith.constant 0 : i32
    %c0_i32_0 = arith.constant 0 : i32
    %c0_i32_1 = arith.constant 0 : i32
    return %c0_i32, %c0_i32_0 : i32, i32
  }
  func.func @transform_4(%arg0: i32) -> (i32, i32) {
    %c0_i32 = arith.constant 0 : i32
    %c0_i32_0 = arith.constant 0 : i32
    %c0_i32_1 = arith.constant 0 : i32
    return %c0_i32, %c0_i32_0 : i32, i32
  }
  func.func @transform_5(%arg0: i32) -> (i32, i32) {
    %c0_i32 = arith.constant 0 : i32
    %c0_i32_0 = arith.constant 0 : i32
    %c0_i32_1 = arith.constant 0 : i32
    return %c0_i32, %c0_i32_0 : i32, i32
  }
  func.func @transform_6(%arg0: i32) -> (i32, i32) {
    %c0_i32 = arith.constant 0 : i32
    %c0_i32_0 = arith.constant 0 : i32
    %c0_i32_1 = arith.constant 0 : i32
    return %c0_i32, %c0_i32_0 : i32, i32
  }
  func.func @transform_7(%arg0: i32) -> (i32, i32) {
    %c0_i32 = arith.constant 0 : i32
    %c0_i32_0 = arith.constant 0 : i32
    return %c0_i32, %arg0 : i32, i32
  }
}

</mosaic_0001>

<llo_original>
// kernel: digits_convnet_forward.1
$region0: #{digits_convnet_forward.1}
  #allocation0 [shape = 'u32[]', space=smem, size = 0x4, offset = 0x4, fixed_abs, tag = 'smem constant byte address 0x4 - core index']
  #allocation1 [shape = 'u32[144,128]{1,0:T(1,128)}', space=vmem, size = 0x12000, scoped, tag = 'internal scratch']
  %s0 = inlined_call_operand.vmem [shape: bf16[128,64], index: 0, kind: input, shape index: {}]
  %s1 = inlined_call_operand.vmem [shape: bf16[4,72,64], index: 1, kind: input, shape index: {}]
  %s2 = inlined_call_operand.vmem [shape: f32[72,1], index: 2, kind: input, shape index: {}]
  %s3 = inlined_call_operand.vmem [shape: f32[4,72], index: 3, kind: input, shape index: {}]
  %s4 = inlined_call_operand.vmem [shape: f32[4,1], index: 4, kind: input, shape index: {}]
  %s5 = inlined_call_operand.vmem [shape: f32[16,4], index: 5, kind: input, shape index: {}]
  %s6 = inlined_call_operand.vmem [shape: f32[16,1], index: 6, kind: input, shape index: {}]
  %s7 = inlined_call_operand.vmem [shape: f32[16,128], index: 7, kind: output, shape index: {}]
  %s8 = sld [smem:[#allocation0]]
  $region38: #{digits_convnet_forward.1} parent=0
    _
  %s10 = ssub.s32 1, %s8
  %s11 = scalar_select 0, %s10, %s8
  // Predicated region
  $region2: #{digits_convnet_forward.1} parent=0 // pred_check
    _
  $region3: #{digits_convnet_forward.1} parent=0 // pred_check_branch
    %13 = sbr.rel (0) target = $region5
  $region4: #{digits_convnet_forward.1} parent=0 // pred_region
    _
  $region5: #{digits_convnet_forward.1} parent=0 // pred_fallthru
    _
  // Predicated region
  $region6: #{digits_convnet_forward.1} parent=0 // pred_check
    _
  $region7: #{digits_convnet_forward.1} parent=0 // pred_check_branch
    %15 = sbr.rel (0) target = $region9
  $region8: #{digits_convnet_forward.1} parent=0 // pred_region
    _
  $region9: #{digits_convnet_forward.1} parent=0 // pred_fallthru
    _
  // Predicated region
  $region10: #{digits_convnet_forward.1} parent=0 // pred_check
    _
  $region11: #{digits_convnet_forward.1} parent=0 // pred_check_branch
    %17 = sbr.rel (0) target = $region13
  $region12: #{digits_convnet_forward.1} parent=0 // pred_region
    _
  $region13: #{digits_convnet_forward.1} parent=0 // pred_fallthru
    _
  // Predicated region
  $region14: #{digits_convnet_forward.1} parent=0 // pred_check
    _
  $region15: #{digits_convnet_forward.1} parent=0 // pred_check_branch
    %19 = sbr.rel (0) target = $region17
  $region16: #{digits_convnet_forward.1} parent=0 // pred_region
    _
  $region17: #{digits_convnet_forward.1} parent=0 // pred_fallthru
    _
  // Predicated region
  $region18: #{digits_convnet_forward.1} parent=0 // pred_check
    _
  $region19: #{digits_convnet_forward.1} parent=0 // pred_check_branch
    %21 = sbr.rel (0) target = $region21
  $region20: #{digits_convnet_forward.1} parent=0 // pred_region
    _
  $region21: #{digits_convnet_forward.1} parent=0 // pred_fallthru
    _
  // Predicated region
  $region22: #{digits_convnet_forward.1} parent=0 // pred_check
    _
  $region23: #{digits_convnet_forward.1} parent=0 // pred_check_branch
    %23 = sbr.rel (0) target = $region25
  $region24: #{digits_convnet_forward.1} parent=0 // pred_region
    _
  $region25: #{digits_convnet_forward.1} parent=0 // pred_fallthru
    _
  // Predicated region
  $region26: #{digits_convnet_forward.1} parent=0 // pred_check
    _
  $region27: #{digits_convnet_forward.1} parent=0 // pred_check_branch
    %25 = sbr.rel (0) target = $region29
  $region28: #{digits_convnet_forward.1} parent=0 // pred_region
    _
  $region29: #{digits_convnet_forward.1} parent=0 // pred_fallthru
    _
  %v27 = vld [vmem:[%s0] sm:$0xf]
  %v28 = vld [vmem:[%s0 + $0x4] sm:$0xf]
  %v29 = vld [vmem:[%s0 + $0x8] sm:$0xf]
  %v30 = vld [vmem:[%s0 + $0xc] sm:$0xf]
  %v31 = vld [vmem:[%s0 + $0x10] sm:$0xf]
  %v32 = vld [vmem:[%s0 + $0x14] sm:$0xf]
  %v33 = vld [vmem:[%s0 + $0x18] sm:$0xf]
  %v34 = vld [vmem:[%s0 + $0x1c] sm:$0xf]
  %v35 = vld [vmem:[%s0 + $0x20] sm:$0xf]
  %v36 = vld [vmem:[%s0 + $0x24] sm:$0xf]
  %v37 = vld [vmem:[%s0 + $0x28] sm:$0xf]
  %v38 = vld [vmem:[%s0 + $0x2c] sm:$0xf]
  %v39 = vld [vmem:[%s0 + $0x30] sm:$0xf]
  %v40 = vld [vmem:[%s0 + $0x34] sm:$0xf]
  %v41 = vld [vmem:[%s0 + $0x38] sm:$0xf]
  %v42 = vld [vmem:[%s0 + $0x3c] sm:$0xf]
  %v43 = vld [vmem:[%s1] sm:$0xf]
  %v44 = vld [vmem:[%s1 + $0x4] sm:$0xf]
  %v45 = vld [vmem:[%s1 + $0x8] sm:$0xf]
  %v46 = vld [vmem:[%s1 + $0xc] sm:$0xf]
  %v47 = vld [vmem:[%s1 + $0x10] sm:$0xf]
  %v48 = vld [vmem:[%s1 + $0x14] sm:$0xf]
  %v49 = vld [vmem:[%s1 + $0x18] sm:$0xf]
  %v50 = vld [vmem:[%s1 + $0x1c] sm:$0xf]
  %v51 = vld [vmem:[%s1 + $0x20] sm:$0xf]
  %v61 = vunpack.c.l.b16 %v43
  %v62 = vunpack.c.l.b16 %v44
  %v63 = vunpack.c.l.b16 %v45
  %v64 = vunpack.c.l.b16 %v46
  %v65 = vunpack.c.l.b16 %v47
  %v66 = vunpack.c.l.b16 %v48
  %v67 = vunpack.c.l.b16 %v49
  %v68 = vunpack.c.l.b16 %v50
  %v69 = vunpack.c.l.b16 %v51
  %v70 = vpack.c.b16 %v62, %v61
  %v71 = vpack.c.b16 %v64, %v63
  %v72 = vpack.c.b16 %v66, %v65
  %v73 = vpack.c.b16 %v68, %v67
  %v74 = vpack.c.b16 %v69, %v69
  %v91 = vunpack.c.l.b16 %v27
  %v92 = vunpack.c.l.b16 %v28
  %v93 = vunpack.c.l.b16 %v29
  %v94 = vunpack.c.l.b16 %v30
  %v95 = vunpack.c.l.b16 %v31
  %v96 = vunpack.c.l.b16 %v32
  %v97 = vunpack.c.l.b16 %v33
  %v98 = vunpack.c.l.b16 %v34
  %v99 = vunpack.c.l.b16 %v35
  %v100 = vunpack.c.l.b16 %v36
  %v101 = vunpack.c.l.b16 %v37
  %v102 = vunpack.c.l.b16 %v38
  %v103 = vunpack.c.l.b16 %v39
  %v104 = vunpack.c.l.b16 %v40
  %v105 = vunpack.c.l.b16 %v41
  %v106 = vunpack.c.l.b16 %v42
  %v107 = vpack.c.b16 %v92, %v91
  %v108 = vpack.c.b16 %v94, %v93
  %v109 = vpack.c.b16 %v96, %v95
  %v110 = vpack.c.b16 %v98, %v97
  %v111 = vpack.c.b16 %v100, %v99
  %v112 = vpack.c.b16 %v102, %v101
  %v113 = vpack.c.b16 %v104, %v103
  %v114 = vpack.c.b16 %v106, %v105
  %vm115 = vcmask 523264
  %v117 = vsel %vm115, %v70, 0
  %v120 = vsel %vm115, %v71, 0
  %v123 = vsel %vm115, %v72, 0
  %v126 = vsel %vm115, %v73, 0
  %v129 = vsel %vm115, %v74, 0
  %v132 = vsel %vm115, %v107, 0
  %v135 = vsel %vm115, %v108, 0
  %v138 = vsel %vm115, %v109, 0
  %v141 = vsel %vm115, %v110, 0
  %v144 = vsel %vm115, %v111, 0
  %v147 = vsel %vm115, %v112, 0
  %v150 = vsel %vm115, %v113, 0
  %v153 = vsel %vm115, %v114, 0
  %155 = vmatprep.subr.bf16.mxu0 0
  %156 = vmatpush1.bf16.xpose.msra.mxu0 %v132
  %157 = vmatprep.subr.bf16.mxu0 0
  %158 = vmatpush1.bf16.xpose.msra.mxu0 %v135
  %159 = vmatprep.subr.bf16.mxu0 0
  %160 = vmatpush1.bf16.xpose.msra.mxu0 %v138
  %161 = vmatprep.subr.bf16.mxu0 0
  %162 = vmatpush1.bf16.xpose.msra.mxu0 %v141
  %163 = vmatprep.subr.bf16.mxu0 0
  %164 = vmatpush1.bf16.xpose.msra.mxu0 %v144
  %165 = vmatprep.subr.bf16.mxu0 0
  %166 = vmatpush1.bf16.xpose.msra.mxu0 %v147
  %167 = vmatprep.subr.bf16.mxu0 0
  %168 = vmatpush1.bf16.xpose.msra.mxu0 %v150
  %169 = vmatprep.subr.bf16.mxu0 0
  %170 = vmatpush1.bf16.xpose.msra.mxu0 %v153
  %171 = vmatprep.subr.bf16.mxu0 0
  %172 = vmatpush1.bf16.xpose.msra.mxu0 0
  %173 = vmatprep.subr.bf16.mxu0 0
  %174 = vmatpush1.bf16.xpose.msra.mxu0 0
  %175 = vmatprep.subr.bf16.mxu0 0
  %176 = vmatpush1.bf16.xpose.msra.mxu0 0
  %177 = vmatprep.subr.bf16.mxu0 0
  %178 = vmatpush1.bf16.xpose.msra.mxu0 0
  %179 = vmatprep.subr.bf16.mxu0 0
  %180 = vmatpush1.bf16.xpose.msra.mxu0 0
  %181 = vmatprep.subr.bf16.mxu0 0
  %182 = vmatpush1.bf16.xpose.msra.mxu0 0
  %183 = vmatprep.subr.bf16.mxu0 0
  %184 = vmatpush1.bf16.xpose.msra.mxu0 0
  %185 = vmatprep.subr.bf16.mxu0 0
  %186 = vmatpush1.bf16.xpose.msra.mxu0 0
  %187 = vmatprep.mubr.bf16.mxu0 0
  %188 = vmatmul.mubr.bf16.gmra.mrb[0].mxu0 %v117
  %v189 = vpop.f32.mrb[0].mxu0
  %v190 = vadd.f32 0.0, %v189
  %v191 = vpop.f32.mrb[0].mxu0
  %v192 = vpop.f32.mrb[0].mxu0
  %v193 = vadd.f32 0.0, %v192
  %v194 = vpop.f32.mrb[0].mxu0
  %195 = vmatprep.mubr.bf16.mxu0 0
  %196 = vmatmul.mubr.bf16.gmra.mrb[0].mxu0 %v120
  %v197 = vpop.f32.mrb[0].mxu0
  %v198 = vadd.f32 0.0, %v197
  %v199 = vpop.f32.mrb[0].mxu0
  %v200 = vpop.f32.mrb[0].mxu0
  %v201 = vadd.f32 0.0, %v200
  %v202 = vpop.f32.mrb[0].mxu0
  %203 = vmatprep.mubr.bf16.mxu0 0
  %204 = vmatmul.mubr.bf16.gmra.mrb[0].mxu0 %v123
  %v205 = vpop.f32.mrb[0].mxu0
  %v206 = vadd.f32 0.0, %v205
  %v207 = vpop.f32.mrb[0].mxu0
  %v208 = vpop.f32.mrb[0].mxu0
  %v209 = vadd.f32 0.0, %v208
  %v210 = vpop.f32.mrb[0].mxu0
  %211 = vmatprep.mubr.bf16.mxu0 0
  %212 = vmatmul.mubr.bf16.gmra.mrb[0].mxu0 %v126
  %v213 = vpop.f32.mrb[0].mxu0
  %v214 = vadd.f32 0.0, %v213
  %v215 = vpop.f32.mrb[0].mxu0
  %v216 = vpop.f32.mrb[0].mxu0
  %v217 = vadd.f32 0.0, %v216
  %v218 = vpop.f32.mrb[0].mxu0
  %219 = vmatprep.mubr.bf16.mxu0 0
  %220 = vmatmul.mubr.bf16.gmra.mrb[0].mxu0 %v129
  %v221 = vpop.f32.mrb[0].mxu0
  %v222 = vadd.f32 0.0, %v221
  %v223 = vpop.f32.mrb[0].mxu0
  %v224 = vpop.f32.mrb[0].mxu0
  %v225 = vpop.f32.mrb[0].mxu0
  %226 = vdwg.mxu0
  %s227 = scalar_lea.vmem %s1, 36
  %v228 = vld [vmem:[%s227] sm:$0xf]
  %v229 = vld [vmem:[%s227 + $0x4] sm:$0xf]
  %v230 = vld [vmem:[%s227 + $0x8] sm:$0xf]
  %v231 = vld [vmem:[%s227 + $0xc] sm:$0xf]
  %v232 = vld [vmem:[%s227 + $0x10] sm:$0xf]
  %v233 = vld [vmem:[%s227 + $0x14] sm:$0xf]
  %v234 = vld [vmem:[%s227 + $0x18] sm:$0xf]
  %v235 = vld [vmem:[%s227 + $0x1c] sm:$0xf]
  %v236 = vld [vmem:[%s227 + $0x20] sm:$0xf]
  %v246 = vunpack.c.l.b16 %v228
  %v247 = vunpack.c.l.b16 %v229
  %v248 = vunpack.c.l.b16 %v230
  %v249 = vunpack.c.l.b16 %v231
  %v250 = vunpack.c.l.b16 %v232
  %v251 = vunpack.c.l.b16 %v233
  %v252 = vunpack.c.l.b16 %v234
  %v253 = vunpack.c.l.b16 %v235
  %v254 = vunpack.c.l.b16 %v236
  %v255 = vpack.c.b16 %v247, %v246
  %v256 = vpack.c.b16 %v249, %v248
  %v257 = vpack.c.b16 %v251, %v250
  %v258 = vpack.c.b16 %v253, %v252
  %v259 = vpack.c.b16 %v254, %v254
  %v261 = vsel %vm115, %v255, 0
  %v264 = vsel %vm115, %v256, 0
  %v267 = vsel %vm115, %v257, 0
  %v270 = vsel %vm115, %v258, 0
  %v273 = vsel %vm115, %v259, 0
  %275 = vmatprep.subr.bf16.mxu0 0
  %276 = vmatpush1.bf16.xpose.msra.mxu0 %v132
  %277 = vmatprep.subr.bf16.mxu0 0
  %278 = vmatpush1.bf16.xpose.msra.mxu0 %v135
  %279 = vmatprep.subr.bf16.mxu0 0
  %280 = vmatpush1.bf16.xpose.msra.mxu0 %v138
  %281 = vmatprep.subr.bf16.mxu0 0
  %282 = vmatpush1.bf16.xpose.msra.mxu0 %v141
  %283 = vmatprep.subr.bf16.mxu0 0
  %284 = vmatpush1.bf16.xpose.msra.mxu0 %v144
  %285 = vmatprep.subr.bf16.mxu0 0
  %286 = vmatpush1.bf16.xpose.msra.mxu0 %v147
  %287 = vmatprep.subr.bf16.mxu0 0
  %288 = vmatpush1.bf16.xpose.msra.mxu0 %v150
  %289 = vmatprep.subr.bf16.mxu0 0
  %290 = vmatpush1.bf16.xpose.msra.mxu0 %v153
  %291 = vmatprep.subr.bf16.mxu0 0
  %292 = vmatpush1.bf16.xpose.msra.mxu0 0
  %293 = vmatprep.subr.bf16.mxu0 0
  %294 = vmatpush1.bf16.xpose.msra.mxu0 0
  %295 = vmatprep.subr.bf16.mxu0 0
  %296 = vmatpush1.bf16.xpose.msra.mxu0 0
  %297 = vmatprep.subr.bf16.mxu0 0
  %298 = vmatpush1.bf16.xpose.msra.mxu0 0
  %299 = vmatprep.subr.bf16.mxu0 0
  %300 = vmatpush1.bf16.xpose.msra.mxu0 0
  %301 = vmatprep.subr.bf16.mxu0 0
  %302 = vmatpush1.bf16.xpose.msra.mxu0 0
  %303 = vmatprep.subr.bf16.mxu0 0
  %304 = vmatpush1.bf16.xpose.msra.mxu0 0
  %305 = vmatprep.subr.bf16.mxu0 0
  %306 = vmatpush1.bf16.xpose.msra.mxu0 0
  %307 = vmatprep.mubr.bf16.mxu0 0
  %308 = vmatmul.mubr.bf16.gmra.mrb[0].mxu0 %v261
  %v309 = vpop.f32.mrb[0].mxu0
  %v310 = vadd.f32 0.0, %v309
  %v311 = vpop.f32.mrb[0].mxu0
  %v312 = vpop.f32.mrb[0].mxu0
  %v313 = vadd.f32 0.0, %v312
  %v314 = vpop.f32.mrb[0].mxu0
  %315 = vmatprep.mubr.bf16.mxu0 0
  %316 = vmatmul.mubr.bf16.gmra.mrb[0].mxu0 %v264
  %v317 = vpop.f32.mrb[0].mxu0
  %v318 = vadd.f32 0.0, %v317
  %v319 = vpop.f32.mrb[0].mxu0
  %v320 = vpop.f32.mrb[0].mxu0
  %v321 = vadd.f32 0.0, %v320
  %v322 = vpop.f32.mrb[0].mxu0
  %323 = vmatprep.mubr.bf16.mxu0 0
  %324 = vmatmul.mubr.bf16.gmra.mrb[0].mxu0 %v267
  %v325 = vpop.f32.mrb[0].mxu0
  %v326 = vadd.f32 0.0, %v325
  %v327 = vpop.f32.mrb[0].mxu0
  %v328 = vpop.f32.mrb[0].mxu0
  %v329 = vadd.f32 0.0, %v328
  %v330 = vpop.f32.mrb[0].mxu0
  %331 = vmatprep.mubr.bf16.mxu0 0
  %332 = vmatmul.mubr.bf16.gmra.mrb[0].mxu0 %v270
  %v333 = vpop.f32.mrb[0].mxu0
  %v334 = vadd.f32 0.0, %v333
  %v335 = vpop.f32.mrb[0].mxu0
  %v336 = vpop.f32.mrb[0].mxu0
  %v337 = vadd.f32 0.0, %v336
  %v338 = vpop.f32.mrb[0].mxu0
  %339 = vmatprep.mubr.bf16.mxu0 0
  %340 = vmatmul.mubr.bf16.gmra.mrb[0].mxu0 %v273
  %v341 = vpop.f32.mrb[0].mxu0
  %v342 = vadd.f32 0.0, %v341
  %v343 = vpop.f32.mrb[0].mxu0
  %v344 = vpop.f32.mrb[0].mxu0
  %v345 = vpop.f32.mrb[0].mxu0
  %346 = vdwg.mxu0
  %v347 = vmax.f32 %v190, %v310
  %v348 = vmax.f32 %v193, %v313
  %v349 = vmax.f32 %v198, %v318
  %v350 = vmax.f32 %v201, %v321
  %v351 = vmax.f32 %v206, %v326
  %v352 = vmax.f32 %v209, %v329
  %v353 = vmax.f32 %v214, %v334
  %v354 = vmax.f32 %v217, %v337
  %v355 = vmax.f32 %v222, %v342
  %s356 = scalar_lea.vmem %s1, 72
  %v357 = vld [vmem:[%s356] sm:$0xf]
  %v358 = vld [vmem:[%s356 + $0x4] sm:$0xf]
  %v359 = vld [vmem:[%s356 + $0x8] sm:$0xf]
  %v360 = vld [vmem:[%s356 + $0xc] sm:$0xf]
  %v361 = vld [vmem:[%s356 + $0x10] sm:$0xf]
  %v362 = vld [vmem:[%s356 + $0x14] sm:$0xf]
  %v363 = vld [vmem:[%s356 + $0x18] sm:$0xf]
  %v364 = vld [vmem:[%s356 + $0x1c] sm:$0xf]
  %v365 = vld [vmem:[%s356 + $0x20] sm:$0xf]
  %v375 = vunpack.c.l.b16 %v357
  %v376 = vunpack.c.l.b16 %v358
  %v377 = vunpack.c.l.b16 %v359
  %v378 = vunpack.c.l.b16 %v360
  %v379 = vunpack.c.l.b16 %v361
  %v380 = vunpack.c.l.b16 %v362
  %v381 = vunpack.c.l.b16 %v363
  %v382 = vunpack.c.l.b16 %v364
  %v383 = vunpack.c.l.b16 %v365
  %v384 = vpack.c.b16 %v376, %v375
  %v385 = vpack.c.b16 %v378, %v377
  %v386 = vpack.c.b16 %v380, %v379
  %v387 = vpack.c.b16 %v382, %v381
  %v388 = vpack.c.b16 %v383, %v383
  %v390 = vsel %vm115, %v384, 0
  %v393 = vsel %vm115, %v385, 0
  %v396 = vsel %vm115, %v386, 0
  %v399 = vsel %vm115, %v387, 0
  %v402 = vsel %vm115, %v388, 0
  %404 = vmatprep.subr.bf16.mxu0 0
  %405 = vmatpush1.bf16.xpose.msra.mxu0 %v132
  %406 = vmatprep.subr.bf16.mxu0 0
  %407 = vmatpush1.bf16.xpose.msra.mxu0 %v135
  %408 = vmatprep.subr.bf16.mxu0 0
  %409 = vmatpush1.bf16.xpose.msra.mxu0 %v138
  %410 = vmatprep.subr.bf16.mxu0 0
  %411 = vmatpush1.bf16.xpose.msra.mxu0 %v141
  %412 = vmatprep.subr.bf16.mxu0 0
  %413 = vmatpush1.bf16.xpose.msra.mxu0 %v144
  %414 = vmatprep.subr.bf16.mxu0 0
  %415 = vmatpush1.bf16.xpose.msra.mxu0 %v147
  %416 = vmatprep.subr.bf16.mxu0 0
  %417 = vmatpush1.bf16.xpose.msra.mxu0 %v150
  %418 = vmatprep.subr.bf16.mxu0 0
  %419 = vmatpush1.bf16.xpose.msra.mxu0 %v153
  %420 = vmatprep.subr.bf16.mxu0 0
  %421 = vmatpush1.bf16.xpose.msra.mxu0 0
  %422 = vmatprep.subr.bf16.mxu0 0
  %423 = vmatpush1.bf16.xpose.msra.mxu0 0
  %424 = vmatprep.subr.bf16.mxu0 0
  %425 = vmatpush1.bf16.xpose.msra.mxu0 0
  %426 = vmatprep.subr.bf16.mxu0 0
  %427 = vmatpush1.bf16.xpose.msra.mxu0 0
  %428 = vmatprep.subr.bf16.mxu0 0
  %429 = vmatpush1.bf16.xpose.msra.mxu0 0
  %430 = vmatprep.subr.bf16.mxu0 0
  %431 = vmatpush1.bf16.xpose.msra.mxu0 0
  %432 = vmatprep.subr.bf16.mxu0 0
  %433 = vmatpush1.bf16.xpose.msra.mxu0 0
  %434 = vmatprep.subr.bf16.mxu0 0
  %435 = vmatpush1.bf16.xpose.msra.mxu0 0
  %436 = vmatprep.mubr.bf16.mxu0 0
  %437 = vmatmul.mubr.bf16.gmra.mrb[0].mxu0 %v390
  %v438 = vpop.f32.mrb[0].mxu0
  %v439 = vadd.f32 0.0, %v438
  %v440 = vpop.f32.mrb[0].mxu0
  %v441 = vpop.f32.mrb[0].mxu0
  %v442 = vadd.f32 0.0, %v441
  %v443 = vpop.f32.mrb[0].mxu0
  %444 = vmatprep.mubr.bf16.mxu0 0
  %445 = vmatmul.mubr.bf16.gmra.mrb[0].mxu0 %v393
  %v446 = vpop.f32.mrb[0].mxu0
  %v447 = vadd.f32 0.0, %v446
  %v448 = vpop.f32.mrb[0].mxu0
  %v449 = vpop.f32.mrb[0].mxu0
  %v450 = vadd.f32 0.0, %v449
  %v451 = vpop.f32.mrb[0].mxu0
  %452 = vmatprep.mubr.bf16.mxu0 0
  %453 = vmatmul.mubr.bf16.gmra.mrb[0].mxu0 %v396
  %v454 = vpop.f32.mrb[0].mxu0
  %v455 = vadd.f32 0.0, %v454
  %v456 = vpop.f32.mrb[0].mxu0
  %v457 = vpop.f32.mrb[0].mxu0
  %v458 = vadd.f32 0.0, %v457
  %v459 = vpop.f32.mrb[0].mxu0
  %460 = vmatprep.mubr.bf16.mxu0 0
  %461 = vmatmul.mubr.bf16.gmra.mrb[0].mxu0 %v399
  %v462 = vpop.f32.mrb[0].mxu0
  %v463 = vadd.f32 0.0, %v462
  %v464 = vpop.f32.mrb[0].mxu0
  %v465 = vpop.f32.mrb[0].mxu0
  %v466 = vadd.f32 0.0, %v465
  %v467 = vpop.f32.mrb[0].mxu0
  %468 = vmatprep.mubr.bf16.mxu0 0
  %469 = vmatmul.mubr.bf16.gmra.mrb[0].mxu0 %v402
  %v470 = vpop.f32.mrb[0].mxu0
  %v471 = vadd.f32 0.0, %v470
  %v472 = vpop.f32.mrb[0].mxu0
  %v473 = vpop.f32.mrb[0].mxu0
  %v474 = vpop.f32.mrb[0].mxu0
  %475 = vdwg.mxu0
  %v476 = vmax.f32 %v347, %v439
  %v477 = vmax.f32 %v348, %v442
  %v478 = vmax.f32 %v349, %v447
  %v479 = vmax.f32 %v350, %v450
  %v480 = vmax.f32 %v351, %v455
  %v481 = vmax.f32 %v352, %v458
  %v482 = vmax.f32 %v353, %v463
  %v483 = vmax.f32 %v354, %v466
  %v484 = vmax.f32 %v355, %v471
  %s485 = scalar_lea.vmem %s1, 108
  %v486 = vld [vmem:[%s485] sm:$0xf]
  %v487 = vld [vmem:[%s485 + $0x4] sm:$0xf]
  %v488 = vld [vmem:[%s485 + $0x8] sm:$0xf]
  %v489 = vld [vmem:[%s485 + $0xc] sm:$0xf]
  %v490 = vld [vmem:[%s485 + $0x10] sm:$0xf]
  %v491 = vld [vmem:[%s485 + $0x14] sm:$0xf]
  %v492 = vld [vmem:[%s485 + $0x18] sm:$0xf]
  %v493 = vld [vmem:[%s485 + $0x1c] sm:$0xf]
  %v494 = vld [vmem:[%s485 + $0x20] sm:$0xf]
  %v504 = vunpack.c.l.b16 %v486
  %v505 = vunpack.c.l.b16 %v487
  %v506 = vunpack.c.l.b16 %v488
  %v507 = vunpack.c.l.b16 %v489
  %v508 = vunpack.c.l.b16 %v490
  %v509 = vunpack.c.l.b16 %v491
  %v510 = vunpack.c.l.b16 %v492
  %v511 = vunpack.c.l.b16 %v493
  %v512 = vunpack.c.l.b16 %v494
  %v513 = vpack.c.b16 %v505, %v504
  %v514 = vpack.c.b16 %v507, %v506
  %v515 = vpack.c.b16 %v509, %v508
  %v516 = vpack.c.b16 %v511, %v510
  %v517 = vpack.c.b16 %v512, %v512
  %v519 = vsel %vm115, %v513, 0
  %v522 = vsel %vm115, %v514, 0
  %v525 = vsel %vm115, %v515, 0
  %v528 = vsel %vm115, %v516, 0
  %v531 = vsel %vm115, %v517, 0
  %533 = vmatprep.subr.bf16.mxu0 0
  %534 = vmatpush1.bf16.xpose.msra.mxu0 %v132
  %535 = vmatprep.subr.bf16.mxu0 0
  %536 = vmatpush1.bf16.xpose.msra.mxu0 %v135
  %537 = vmatprep.subr.bf16.mxu0 0
  %538 = vmatpush1.bf16.xpose.msra.mxu0 %v138
  %539 = vmatprep.subr.bf16.mxu0 0
  %540 = vmatpush1.bf16.xpose.msra.mxu0 %v141
  %541 = vmatprep.subr.bf16.mxu0 0
  %542 = vmatpush1.bf16.xpose.msra.mxu0 %v144
  %543 = vmatprep.subr.bf16.mxu0 0
  %544 = vmatpush1.bf16.xpose.msra.mxu0 %v147
  %545 = vmatprep.subr.bf16.mxu0 0
  %546 = vmatpush1.bf16.xpose.msra.mxu0 %v150
  %547 = vmatprep.subr.bf16.mxu0 0
  %548 = vmatpush1.bf16.xpose.msra.mxu0 %v153
  %549 = vmatprep.subr.bf16.mxu0 0
  %550 = vmatpush1.bf16.xpose.msra.mxu0 0
  %551 = vmatprep.subr.bf16.mxu0 0
  %552 = vmatpush1.bf16.xpose.msra.mxu0 0
  %553 = vmatprep.subr.bf16.mxu0 0
  %554 = vmatpush1.bf16.xpose.msra.mxu0 0
  %555 = vmatprep.subr.bf16.mxu0 0
  %556 = vmatpush1.bf16.xpose.msra.mxu0 0
  %557 = vmatprep.subr.bf16.mxu0 0
  %558 = vmatpush1.bf16.xpose.msra.mxu0 0
  %559 = vmatprep.subr.bf16.mxu0 0
  %560 = vmatpush1.bf16.xpose.msra.mxu0 0
  %561 = vmatprep.subr.bf16.mxu0 0
  %562 = vmatpush1.bf16.xpose.msra.mxu0 0
  %563 = vmatprep.subr.bf16.mxu0 0
  %564 = vmatpush1.bf16.xpose.msra.mxu0 0
  %565 = vmatprep.mubr.bf16.mxu0 0
  %566 = vmatmul.mubr.bf16.gmra.mrb[0].mxu0 %v519
  %v567 = vpop.f32.mrb[0].mxu0
  %v568 = vadd.f32 0.0, %v567
  %v569 = vpop.f32.mrb[0].mxu0
  %v570 = vpop.f32.mrb[0].mxu0
  %v571 = vadd.f32 0.0, %v570
  %v572 = vpop.f32.mrb[0].mxu0
  %573 = vmatprep.mubr.bf16.mxu0 0
  %574 = vmatmul.mubr.bf16.gmra.mrb[0].mxu0 %v522
  %v575 = vpop.f32.mrb[0].mxu0
  %v576 = vadd.f32 0.0, %v575
  %v577 = vpop.f32.mrb[0].mxu0
  %v578 = vpop.f32.mrb[0].mxu0
  %v579 = vadd.f32 0.0, %v578
  %v580 = vpop.f32.mrb[0].mxu0
  %581 = vmatprep.mubr.bf16.mxu0 0
  %582 = vmatmul.mubr.bf16.gmra.mrb[0].mxu0 %v525
  %v583 = vpop.f32.mrb[0].mxu0
  %v584 = vadd.f32 0.0, %v583
  %v585 = vpop.f32.mrb[0].mxu0
  %v586 = vpop.f32.mrb[0].mxu0
  %v587 = vadd.f32 0.0, %v586
  %v588 = vpop.f32.mrb[0].mxu0
  %589 = vmatprep.mubr.bf16.mxu0 0
  %590 = vmatmul.mubr.bf16.gmra.mrb[0].mxu0 %v528
  %v591 = vpop.f32.mrb[0].mxu0
  %v592 = vadd.f32 0.0, %v591
  %v593 = vpop.f32.mrb[0].mxu0
  %v594 = vpop.f32.mrb[0].mxu0
  %v595 = vadd.f32 0.0, %v594
  %v596 = vpop.f32.mrb[0].mxu0
  %597 = vmatprep.mubr.bf16.mxu0 0
  %598 = vmatmul.mubr.bf16.gmra.mrb[0].mxu0 %v531
  %v599 = vpop.f32.mrb[0].mxu0
  %v600 = vadd.f32 0.0, %v599
  %v601 = vpop.f32.mrb[0].mxu0
  %v602 = vpop.f32.mrb[0].mxu0
  %v603 = vpop.f32.mrb[0].mxu0
  %604 = vdwg.mxu0
  %v605 = vmax.f32 %v476, %v568
  %v606 = vmax.f32 %v477, %v571
  %v607 = vmax.f32 %v478, %v576
  %v608 = vmax.f32 %v479, %v579
  %v609 = vmax.f32 %v480, %v584
  %v610 = vmax.f32 %v481, %v587
  %v611 = vmax.f32 %v482, %v592
  %v612 = vmax.f32 %v483, %v595
  %v613 = vmax.f32 %v484, %v600
  %v614 = vld [vmem:[%s2] sm:$0xff]
  %v615 = vld [vmem:[%s2 + $0x8] sm:$0xff]
  %v616 = vld [vmem:[%s2 + $0x10] sm:$0xff]
  %v617 = vld [vmem:[%s2 + $0x18] sm:$0xff]
  %v618 = vld [vmem:[%s2 + $0x20] sm:$0xff]
  %v619 = vld [vmem:[%s2 + $0x28] sm:$0xff]
  %v620 = vld [vmem:[%s2 + $0x30] sm:$0xff]
  %v621 = vld [vmem:[%s2 + $0x38] sm:$0xff]
  %v622 = vld [vmem:[%s2 + $0x40] sm:$0xff]
  %624 = vset.pattern.permute.xlu0 0
  %625 = vperm.xlu0 %624, %v614
  %v626 = vpop.permute.xlu0 %625
  %629 = vset.pattern.permute.xlu0 0
  %630 = vperm.xlu0 %629, %v615
  %v631 = vpop.permute.xlu0 %630
  %634 = vset.pattern.permute.xlu0 0
  %635 = vperm.xlu0 %634, %v616
  %v636 = vpop.permute.xlu0 %635
  %639 = vset.pattern.permute.xlu0 0
  %640 = vperm.xlu0 %639, %v617
  %v641 = vpop.permute.xlu0 %640
  %644 = vset.pattern.permute.xlu0 0
  %645 = vperm.xlu0 %644, %v618
  %v646 = vpop.permute.xlu0 %645
  %649 = vset.pattern.permute.xlu0 0
  %650 = vperm.xlu0 %649, %v619
  %v651 = vpop.permute.xlu0 %650
  %654 = vset.pattern.permute.xlu0 0
  %655 = vperm.xlu0 %654, %v620
  %v656 = vpop.permute.xlu0 %655
  %659 = vset.pattern.permute.xlu0 0
  %660 = vperm.xlu0 %659, %v621
  %v661 = vpop.permute.xlu0 %660
  %664 = vset.pattern.permute.xlu0 0
  %665 = vperm.xlu0 %664, %v622
  %v666 = vpop.permute.xlu0 %665
  %v668 = vadd.f32 %v605, %v626
  %v669 = vadd.f32 %v606, %v631
  %v670 = vadd.f32 %v607, %v636
  %v671 = vadd.f32 %v608, %v641
  %v672 = vadd.f32 %v609, %v646
  %v673 = vadd.f32 %v610, %v651
  %v674 = vadd.f32 %v611, %v656
  %v675 = vadd.f32 %v612, %v661
  %v676 = vadd.f32 %v613, %v666
  %v677 = vmax.f32 %v668, 0.0
  %v678 = vmax.f32 %v669, 0.0
  %v679 = vmax.f32 %v670, 0.0
  %v680 = vmax.f32 %v671, 0.0
  %v681 = vmax.f32 %v672, 0.0
  %v682 = vmax.f32 %v673, 0.0
  %v683 = vmax.f32 %v674, 0.0
  %v684 = vmax.f32 %v675, 0.0
  %v685 = vmax.f32 %v676, 0.0
  %v686 = vld [vmem:[%s3] sm:$0xf]
  %v687 = vld [vmem:[%s4] sm:$0xf]
  %689 = vset.pattern.permute.xlu0 0
  %690 = vperm.xlu0 %689, %v687
  %v691 = vpop.permute.xlu0 %690
  %vm693 = vcmask 588800
  %v695 = vsel %vm693, %v686, 0
  %697 = vmatprep.subr.mxu0 0.0
  %698 = vmatpush1.msra.mxu0 %v677
  %699 = vmatprep.subr.mxu0 0.0
  %700 = vmatpush1.msra.mxu0 %v678
  %701 = vmatprep.subr.mxu0 0.0
  %702 = vmatpush1.msra.mxu0 %v679
  %703 = vmatprep.subr.mxu0 0.0
  %704 = vmatpush1.msra.mxu0 %v680
  %705 = vmatprep.subr.mxu0 0.0
  %706 = vmatpush1.msra.mxu0 %v681
  %707 = vmatprep.subr.mxu0 0.0
  %708 = vmatpush1.msra.mxu0 %v682
  %709 = vmatprep.subr.mxu0 0.0
  %710 = vmatpush1.msra.mxu0 %v683
  %711 = vmatprep.subr.mxu0 0.0
  %712 = vmatpush1.msra.mxu0 %v684
  %713 = vmatprep.subr.mxu0 0.0
  %714 = vmatpush1.msra.mxu0 %v685
  %715 = vmatprep.subr.mxu0 0.0
  %716 = vmatpush1.msra.mxu0 0.0
  %717 = vmatprep.subr.mxu0 0.0
  %718 = vmatpush1.msra.mxu0 0.0
  %719 = vmatprep.subr.mxu0 0.0
  %720 = vmatpush1.msra.mxu0 0.0
  %721 = vmatprep.subr.mxu0 0.0
  %722 = vmatpush1.msra.mxu0 0.0
  %723 = vmatprep.subr.mxu0 0.0
  %724 = vmatpush1.msra.mxu0 0.0
  %725 = vmatprep.subr.mxu0 0.0
  %726 = vmatpush1.msra.mxu0 0.0
  %727 = vmatprep.subr.mxu0 0.0
  %728 = vmatpush1.msra.mxu0 0.0
  %729 = vmatprep.subr.mxu0 0.0
  %730 = vmatpush1.msra.mxu0 0.0
  %731 = vmatprep.subr.mxu0 0.0
  %732 = vmatpush1.msra.mxu0 0.0
  %733 = vmatprep.subr.mxu0 0.0
  %734 = vmatpush1.msra.mxu0 0.0
  %735 = vmatprep.subr.mxu0 0.0
  %736 = vmatpush1.msra.mxu0 0.0
  %737 = vmatprep.subr.mxu0 0.0
  %738 = vmatpush1.msra.mxu0 0.0
  %739 = vmatprep.subr.mxu0 0.0
  %740 = vmatpush1.msra.mxu0 0.0
  %741 = vmatprep.subr.mxu0 0.0
  %742 = vmatpush1.msra.mxu0 0.0
  %743 = vmatprep.subr.mxu0 0.0
  %744 = vmatpush1.msra.mxu0 0.0
  %745 = vmatprep.subr.mxu0 0.0
  %746 = vmatpush1.msra.mxu0 0.0
  %747 = vmatprep.subr.mxu0 0.0
  %748 = vmatpush1.msra.mxu0 0.0
  %749 = vmatprep.subr.mxu0 0.0
  %750 = vmatpush1.msra.mxu0 0.0
  %751 = vmatprep.subr.mxu0 0.0
  %752 = vmatpush1.msra.mxu0 0.0
  %753 = vmatprep.subr.mxu0 0.0
  %754 = vmatpush1.msra.mxu0 0.0
  %755 = vmatprep.subr.mxu0 0.0
  %756 = vmatpush1.msra.mxu0 0.0
  %757 = vmatprep.subr.mxu0 0.0
  %758 = vmatpush1.msra.mxu0 0.0
  %759 = vmatprep.subr.mxu0 0.0
  %760 = vmatpush1.msra.mxu0 0.0
  %761 = vmatprep.mubr.f32.mxu0 0.0
  %762 = vmatmul.mubr.f32.gmra.mrb[0].mxu0 %v695
  %v763 = vpop.f32.mrb[0].mxu0
  %v764 = vadd.f32 %v691, %v763
  %v765 = vpop.f32.mrb[0].mxu0
  %766 = vdwg.mxu0
  %v767 = vmax.f32 %v764, 0.0
  %v768 = vld [vmem:[%s5] sm:$0xff]
  %v769 = vld [vmem:[%s5 + $0x8] sm:$0xff]
  %v770 = vld [vmem:[%s6] sm:$0xff]
  %v771 = vld [vmem:[%s6 + $0x8] sm:$0xff]
  %773 = vset.pattern.permute.xlu0 0
  %774 = vperm.xlu0 %773, %v770
  %v775 = vpop.permute.xlu0 %774
  %778 = vset.pattern.permute.xlu0 0
  %779 = vperm.xlu0 %778, %v771
  %v780 = vpop.permute.xlu0 %779
  %vm782 = vcmask 31744
  %v784 = vsel %vm782, %v768, 0
  %v787 = vsel %vm782, %v769, 0
  %vm789 = vcmask 1043456
  %v791 = vsel %vm789, %v767, 0
  %793 = vmatprep.subr.mxu0 0.0
  %794 = vmatpush1.msra.mxu0 %v791
  %795 = vmatprep.subr.mxu0 0.0
  %796 = vmatpush1.msra.mxu0 0.0
  %797 = vmatprep.subr.mxu0 0.0
  %798 = vmatpush1.msra.mxu0 0.0
  %799 = vmatprep.subr.mxu0 0.0
  %800 = vmatpush1.msra.mxu0 0.0
  %801 = vmatprep.subr.mxu0 0.0
  %802 = vmatpush1.msra.mxu0 0.0
  %803 = vmatprep.subr.mxu0 0.0
  %804 = vmatpush1.msra.mxu0 0.0
  %805 = vmatprep.subr.mxu0 0.0
  %806 = vmatpush1.msra.mxu0 0.0
  %807 = vmatprep.subr.mxu0 0.0
  %808 = vmatpush1.msra.mxu0 0.0
  %809 = vmatprep.subr.mxu0 0.0
  %810 = vmatpush1.msra.mxu0 0.0
  %811 = vmatprep.subr.mxu0 0.0
  %812 = vmatpush1.msra.mxu0 0.0
  %813 = vmatprep.subr.mxu0 0.0
  %814 = vmatpush1.msra.mxu0 0.0
  %815 = vmatprep.subr.mxu0 0.0
  %816 = vmatpush1.msra.mxu0 0.0
  %817 = vmatprep.subr.mxu0 0.0
  %818 = vmatpush1.msra.mxu0 0.0
  %819 = vmatprep.subr.mxu0 0.0
  %820 = vmatpush1.msra.mxu0 0.0
  %821 = vmatprep.subr.mxu0 0.0
  %822 = vmatpush1.msra.mxu0 0.0
  %823 = vmatprep.subr.mxu0 0.0
  %824 = vmatpush1.msra.mxu0 0.0
  %825 = vmatprep.subr.mxu0 0.0
  %826 = vmatpush1.msra.mxu0 0.0
  %827 = vmatprep.subr.mxu0 0.0
  %828 = vmatpush1.msra.mxu0 0.0
  %829 = vmatprep.subr.mxu0 0.0
  %830 = vmatpush1.msra.mxu0 0.0
  %831 = vmatprep.subr.mxu0 0.0
  %832 = vmatpush1.msra.mxu0 0.0
  %833 = vmatprep.subr.mxu0 0.0
  %834 = vmatpush1.msra.mxu0 0.0
  %835 = vmatprep.subr.mxu0 0.0
  %836 = vmatpush1.msra.mxu0 0.0
  %837 = vmatprep.subr.mxu0 0.0
  %838 = vmatpush1.msra.mxu0 0.0
  %839 = vmatprep.subr.mxu0 0.0
  %840 = vmatpush1.msra.mxu0 0.0
  %841 = vmatprep.subr.mxu0 0.0
  %842 = vmatpush1.msra.mxu0 0.0
  %843 = vmatprep.subr.mxu0 0.0
  %844 = vmatpush1.msra.mxu0 0.0
  %845 = vmatprep.subr.mxu0 0.0
  %846 = vmatpush1.msra.mxu0 0.0
  %847 = vmatprep.subr.mxu0 0.0
  %848 = vmatpush1.msra.mxu0 0.0
  %849 = vmatprep.subr.mxu0 0.0
  %850 = vmatpush1.msra.mxu0 0.0
  %851 = vmatprep.subr.mxu0 0.0
  %852 = vmatpush1.msra.mxu0 0.0
  %853 = vmatprep.subr.mxu0 0.0
  %854 = vmatpush1.msra.mxu0 0.0
  %855 = vmatprep.subr.mxu0 0.0
  %856 = vmatpush1.msra.mxu0 0.0
  %857 = vmatprep.mubr.f32.mxu0 0.0
  %858 = vmatmul.mubr.f32.gmra.mrb[0].mxu0 %v784
  %v859 = vpop.f32.mrb[0].mxu0
  %v860 = vadd.f32 %v775, %v859
  %v861 = vpop.f32.mrb[0].mxu0
  %862 = vmatprep.mubr.f32.mxu0 0.0
  %863 = vmatmul.mubr.f32.gmra.mrb[0].mxu0 %v787
  %v864 = vpop.f32.mrb[0].mxu0
  %v865 = vadd.f32 %v780, %v864
  %v866 = vpop.f32.mrb[0].mxu0
  %867 = vdwg.mxu0
  %868 = vst [vmem:[%s7] sm:$0xff] %v860
  %869 = vst [vmem:[%s7 + $0x8] sm:$0xff] %v865
  // Predicated region
  $region30: #{digits_convnet_forward.1} parent=0 // pred_check
    _
  $region31: #{digits_convnet_forward.1} parent=0 // pred_check_branch
    %871 = sbr.rel (0) target = $region33
  $region32: #{digits_convnet_forward.1} parent=0 // pred_region
    _
  $region33: #{digits_convnet_forward.1} parent=0 // pred_fallthru
    _
  // Predicated region
  $region34: #{digits_convnet_forward.1} parent=0 // pred_check
    _
  $region35: #{digits_convnet_forward.1} parent=0 // pred_check_branch
    %873 = sbr.rel (0) target = $region37
  $region36: #{digits_convnet_forward.1} parent=0 // pred_region
    _
  $region37: #{digits_convnet_forward.1} parent=0 // pred_fallthru
    _

</llo_original>
